<compile_context>
chip_gen: v6e
topology: v6e:2x2x1
jax: 0.10.0
libtpu: 0.0.40
codegen_flags: <defaults>
</compile_context>

<pallas_src>
import functools
import math

import jax
import jax.numpy as jnp
from jax.experimental import pallas as pl
from jax.experimental.pallas import tpu as pltpu


_LANE = 128      # TPU lane width  (last dim)
_SUBLANE = 8     # TPU sublane width (second-to-last dim)


def _round_up(x, m):
    return (x + m - 1) // m * m


def _round_down(x, m):
    return x // m * m


def _vmem_capacity_bytes():
    """Physical VMEM per TensorCore (64 MiB on v7x, 128 MiB on v5e/v6e)."""
    try:
        return int(pltpu.get_tpu_info().vmem_capacity_bytes)
    except Exception:
        return 64 << 20   # conservative default = v7x


def _conv_mm_kernel(x_ref, w_ref, b_ref, o_ref, *, negative_slope,
                    use_activation, compute_dtype):
    """One M-tile: (TM, Kdim) @ (Kdim, C_out_p) + bias -> (leaky)ReLU -> store."""
    xv = x_ref[...]
    if compute_dtype is not None:
        xv = xv.astype(compute_dtype)   # in-kernel cast: no extra HBM pass over x
    acc = jnp.dot(xv, w_ref[...], preferred_element_type=jnp.float32)
    acc = acc + b_ref[...].astype(jnp.float32)
    if use_activation:
        acc = jnp.where(acc > 0, acc, negative_slope * acc)
    o_ref[...] = acc.astype(o_ref.dtype)


def pack_conv1d_params(weight, bias, *, lane_pad=_LANE, compute_dtype=None):
    """Pre-pack (C_out, C_in, K) weight into a (K*C_in, C_out_pad) matmul operand.

    Call once at parameter-init time and pass the result to conv1d_forward via
    `packed_params=`.  `compute_dtype=jnp.bfloat16` stores the weight in bf16
    (halves resident VMEM, native MXU rate on v5e/v6e/v7x); the bias stays f32
    for the f32 epilogue.
    """
    C_out, C_in, K = weight.shape
    if K == 1:
        w2d = weight[:, :, 0].T                                          # (C_in, C_out)
    else:
        w2d = jnp.transpose(weight, (2, 1, 0)).reshape(K * C_in, C_out)  # (K*C_in, C_out)
    C_out_p = _round_up(C_out, lane_pad)
    if C_out_p != C_out:
        w2d = jnp.pad(w2d, ((0, 0), (0, C_out_p - C_out)))
        b2d = jnp.pad(bias, (0, C_out_p - C_out))
    else:
        b2d = bias
    if compute_dtype is not None:
        w2d = w2d.astype(compute_dtype)
    return w2d, b2d.astype(jnp.float32).reshape(1, C_out_p)


def conv1d_forward(x, weight, bias, *, stride=1, padding=0,
                   use_activation=True, use_leaky=True,
                   packed_params=None, compute_dtype=None,
                   keep_padded_cout=False, tile_m_cap=8192):
    """Equivalent of Conv1d.forward (bn=False path).

    x:      (B, N, C_in)
    weight: (C_out, C_in, K)
    bias:   (C_out,)
    returns (B, N_out, C_out)   (or (B, N_out, C_out_padded) if keep_padded_cout)
    """
    B, N, C_in = x.shape
    C_out, C_in_w, K = weight.shape
    assert C_in_w == C_in
    out_dtype = x.dtype

    # --- glue: sequence padding + operand flattening --------------------------
    if padding > 0:
        x = jnp.pad(x, ((0, 0), (padding, padding), (0, 0)))
    N_pad = x.shape[1]
    N_out = (N_pad - K) // stride + 1

    if K == 1:
        xs = x if stride == 1 else x[:, ::stride, :][:, :N_out, :]   # strided slice, no gather
        x2d = xs.reshape(B * N_out, C_in)                            # (M, C_in)
    else:
        # TODO(synk): replace this im2col (K-times larger HBM patches array) with an
        # in-kernel K-tap halo accumulation (haloed row-tile DMA + K shifted matmuls).
        idx = jnp.arange(N_out)[:, None] * stride + jnp.arange(K)[None, :]
        patches = x[:, idx, :]                                       # (B, N_out, K, C_in)
        x2d = patches.reshape(B * N_out, K * C_in)                   # (M, K*C_in)

    # --- packed, lane-dense weight / bias --------------------------------------
    if packed_params is not None:
        w2d, b2d = packed_params
    else:
        w2d, b2d = pack_conv1d_params(weight, bias, compute_dtype=compute_dtype)
    if compute_dtype is not None and w2d.dtype != compute_dtype:
        w2d = w2d.astype(compute_dtype)
    Kdim, C_out_p = w2d.shape
    assert Kdim == K * C_in

    M = x2d.shape[0]
    x_itb = jnp.dtype(x2d.dtype).itemsize
    w_itb = jnp.dtype(w2d.dtype).itemsize
    o_itb = jnp.dtype(out_dtype).itemsize

    # --- per-generation VMEM budget & tile-size selection ----------------------
    vmem_cap = _vmem_capacity_bytes()
    vmem_limit = min(vmem_cap // 2, 48 << 20)            # ~32 MiB on v7x, 48 MiB on v5e/v6e
    # Budget conservatively for double-buffered consts even though we request
    # single buffering below (safe if the request is ignored).
    resident = 2 * (Kdim * C_out_p * w_itb + C_out_p * 4)
    headroom = 2 << 20
    per_row = Kdim * x_itb + C_out_p * o_itb             # streamed x row + out row (double-buffered)
    budget = vmem_limit - resident - headroom
    if budget < 2 * _SUBLANE * per_row:
        # Very large resident weight: allow as much scoped VMEM as the chip permits.
        vmem_limit = max(16 << 20,
                         min(vmem_cap - (8 << 20),
                             resident + headroom + 2 * 512 * per_row))
        budget = vmem_limit - resident - headroom

    tm = budget // (2 * per_row)
    tm = max(_SUBLANE, min(int(tm), tile_m_cap))
    tm = _round_down(tm, _SUBLANE)
    tm = min(tm, _round_up(M, _SUBLANE))                 # never bigger than the problem
    if M >= 2 * _SUBLANE:                                # >=2 tiles: both v7x TCs get work
        tm = min(tm, _round_up((M + 1) // 2, _SUBLANE))
    tm = max(tm, _SUBLANE)
    num_tiles = pl.cdiv(M, tm)                           # ragged last block is masked by Pallas

    negative_slope = 0.1 if use_leaky else 0.0
    kernel = functools.partial(
        _conv_mm_kernel,
        negative_slope=negative_slope,
        use_activation=use_activation,
        compute_dtype=compute_dtype,
    )

    cost = pl.CostEstimate(
        flops=2 * M * Kdim * C_out_p,
        transcendentals=0,
        bytes_accessed=(M * Kdim * x_itb + Kdim * C_out_p * w_itb
                        + C_out_p * 4 + M * C_out_p * o_itb),
    )

    def build_call(single_buffer_consts):
        const_kw = dict(pipeline_mode=pl.Buffered(1)) if single_buffer_consts else {}
        return pl.pallas_call(
            kernel,
            out_shape=jax.ShapeDtypeStruct((M, C_out_p), out_dtype),
            grid=(num_tiles,),
            in_specs=[
                pl.BlockSpec((tm, Kdim), lambda i: (i, 0)),                    # streamed x tiles
                pl.BlockSpec((Kdim, C_out_p), lambda i: (0, 0), **const_kw),   # resident weight
                pl.BlockSpec((1, C_out_p), lambda i: (0, 0), **const_kw),      # resident bias
            ],
            out_specs=pl.BlockSpec((tm, C_out_p), lambda i: (i, 0)),
            compiler_params=pltpu.CompilerParams(
                dimension_semantics=("parallel",),
                vmem_limit_bytes=int(vmem_limit),
            ),
            cost_estimate=cost,
        )

    try:
        out2d = build_call(True)(x2d, w2d, b2d)
    except Exception:
        # Single-buffered resident consts unsupported here -> default double buffering.
        out2d = build_call(False)(x2d, w2d, b2d)

    if keep_padded_cout:
        return out2d.reshape(B, N_out, C_out_p)
    if C_out_p != C_out:
        out2d = out2d[:, :C_out]
    return out2d.reshape(B, N_out, C_out)


def init_conv1d_params(key, in_channels, out_channels, kernel_size=1):
    """Deterministic init mimicking nn.Conv1d default (kaiming-uniform-ish)."""
    kw, kb = jax.random.split(key)
    fan_in = in_channels * kernel_size
    bound = 1.0 / math.sqrt(fan_in)
    weight = jax.random.uniform(
        kw, (out_channels, in_channels, kernel_size),
        minval=-bound, maxval=bound, dtype=jnp.float32)
    bias = jax.random.uniform(
        kb, (out_channels,), minval=-bound, maxval=bound, dtype=jnp.float32)
    return weight, bias


# TODO(synk): bn=True (nn.BatchNorm1d, training-mode batch statistics) is not
# implemented; the module's default bn=False path is what this kernel covers.


if __name__ == "__main__":
    key = jax.random.PRNGKey(0)
    k_x, k_p1, k_p3 = jax.random.split(key, 3)

    B, N, C_in, C_out = 2, 8, 32, 16
    x = jax.random.normal(k_x, (B, N, C_in), dtype=jnp.float32)

    # ---- default config: kernel_size=1, stride=1, padding=0, LeakyReLU(0.1) ----
    w1, b1 = init_conv1d_params(k_p1, C_in, C_out, kernel_size=1)
    packed = pack_conv1d_params(w1, b1)          # done once at "init time"
    y1 = conv1d_forward(x, w1, b1, stride=1, padding=0,
                        use_activation=True, use_leaky=True,
                        packed_params=packed)
    y1 = jax.block_until_ready(y1)

    ref1 = jnp.einsum("bnc,oc->bno", x, w1[:, :, 0]) + b1[None, None, :]
    ref1 = jnp.where(ref1 > 0, ref1, 0.1 * ref1)
    assert y1.shape == (B, N, C_out)
    assert jnp.allclose(y1, ref1, atol=1e-5, rtol=1e-5)

    # ---- K=1, stride=2: strided-slice fast path (no gather) ----
    y1s = conv1d_forward(x, w1, b1, stride=2, padding=0,
                         use_activation=True, use_leaky=True,
                         packed_params=packed)
    y1s = jax.block_until_ready(y1s)
    assert y1s.shape == (B, 4, C_out)
    assert jnp.allclose(y1s, ref1[:, ::2, :], atol=1e-5, rtol=1e-5)

    # ---- bf16 MXU operands (f32 accumulate + f32 epilogue), loose tolerance ----
    packed_bf16 = pack_conv1d_params(w1, b1, compute_dtype=jnp.bfloat16)
    y1b = conv1d_forward(x, w1, b1, packed_params=packed_bf16,
                         compute_dtype=jnp.bfloat16)
    y1b = jax.block_until_ready(y1b)
    assert y1b.shape == (B, N, C_out)
    assert jnp.allclose(y1b, ref1, atol=5e-2, rtol=5e-2)

    # ---- kernel_size=3, padding=1 path (im2col glue + same fused kernel) ----
    w3, b3 = init_conv1d_params(k_p3, C_in, C_out, kernel_size=3)
    y3 = conv1d_forward(x, w3, b3, stride=1, padding=1,
                        use_activation=True, use_leaky=True)
    y3 = jax.block_until_ready(y3)

    x_pad = jnp.pad(x, ((0, 0), (1, 1), (0, 0)))
    idx = jnp.arange(N)[:, None] + jnp.arange(3)[None, :]
    patches = x_pad[:, idx, :]                                  # (B, N, 3, C_in)
    ref3 = jnp.einsum("bnkc,ock->bno", patches, w3) + b3[None, None, :]
    ref3 = jnp.where(ref3 > 0, ref3, 0.1 * ref3)
    assert y3.shape == (B, N, C_out)
    assert jnp.allclose(y3, ref3, atol=1e-4, rtol=1e-4)

    print("KERNEL_OK")
</pallas_src>

<mosaic_0001>
module attributes {stable_mosaic.version = 11 : i64} {
  func.func @_conv_mm_kernel(%arg0: i32, %arg1: memref<8x32xf32, #tpu.memory_space<vmem>>, %arg2: memref<32x128xf32, #tpu.memory_space<vmem>>, %arg3: memref<1x128xf32, #tpu.memory_space<vmem>>, %arg4: memref<8x128xf32, #tpu.memory_space<vmem>>) attributes {dimension_semantics = [#tpu.dimension_semantics<parallel>], iteration_bounds = array<i64: 2>, scalar_prefetch = 0 : i64, scratch_operands = 0 : i64, tpu.core_type = #tpu.core_type<tc>, window_params = [{transform_indices = @transform_0, window_bounds = array<i64: 8, 32>}, {pipeline_mode = #tpu.pipeline_mode<synchronous>, transform_indices = @transform_1, window_bounds = array<i64: 32, 128>}, {pipeline_mode = #tpu.pipeline_mode<synchronous>, transform_indices = @transform_2, window_bounds = array<i64: 1, 128>}, {transform_indices = @transform_3, window_bounds = array<i64: 8, 128>}]} {
    %c0 = arith.constant 0 : index
    %c0_0 = arith.constant 0 : index
    %0 = vector.load %arg1[%c0, %c0_0] : memref<8x32xf32, #tpu.memory_space<vmem>>, vector<8x32xf32>
    %c0_1 = arith.constant 0 : index
    %c0_2 = arith.constant 0 : index
    %1 = vector.load %arg2[%c0_1, %c0_2] : memref<32x128xf32, #tpu.memory_space<vmem>>, vector<32x128xf32>
    %cst = arith.constant dense<0.000000e+00> : vector<8x128xf32>
    %2 = tpu.matmul %0, %1, %cst {dimension_numbers = #tpu.dot_dimension_numbers<[1], [0], [0], [1], [0, 0, 1, 1], [], []>} : vector<8x32xf32>, vector<32x128xf32>, vector<8x128xf32> -> vector<8x128xf32>
    %c0_3 = arith.constant 0 : index
    %c0_4 = arith.constant 0 : index
    %3 = vector.load %arg3[%c0_3, %c0_4] : memref<1x128xf32, #tpu.memory_space<vmem>>, vector<1x128xf32>
    %4 = vector.broadcast %3 : vector<1x128xf32> to vector<8x128xf32>
    %5 = arith.addf %2, %4 : vector<8x128xf32>
    %cst_5 = arith.constant 0.000000e+00 : f32
    %6 = vector.broadcast %cst_5 : f32 to vector<8x128xf32>
    %7 = arith.cmpf ogt, %5, %6 : vector<8x128xf32>
    %cst_6 = arith.constant 1.000000e-01 : f32
    %8 = vector.broadcast %cst_6 : f32 to vector<8x128xf32>
    %9 = arith.mulf %8, %5 : vector<8x128xf32>
    %10 = arith.select %7, %5, %9 : vector<8x128xi1>, vector<8x128xf32>
    %c0_7 = arith.constant 0 : index
    %c0_8 = arith.constant 0 : index
    %11 = vector.load %arg4[%c0_7, %c0_8] : memref<8x128xf32, #tpu.memory_space<vmem>>, vector<8x128xf32>
    tpu.vector_store %arg4[%c0_7, %c0_8], %10 {strides = array<i32>} : memref<8x128xf32, #tpu.memory_space<vmem>>, vector<8x128xf32>,
    return
  }
  func.func @transform_0(%arg0: i32) -> (i32, i32) {
    %c0_i32 = arith.constant 0 : i32
    %c0_i32_0 = arith.constant 0 : i32
    return %arg0, %c0_i32 : i32, i32
  }
  func.func @transform_1(%arg0: i32) -> (i32, i32) {
    %c0_i32 = arith.constant 0 : i32
    %c0_i32_0 = arith.constant 0 : i32
    %c0_i32_1 = arith.constant 0 : i32
    return %c0_i32, %c0_i32_0 : i32, i32
  }
  func.func @transform_2(%arg0: i32) -> (i32, i32) {
    %c0_i32 = arith.constant 0 : i32
    %c0_i32_0 = arith.constant 0 : i32
    %c0_i32_1 = arith.constant 0 : i32
    return %c0_i32, %c0_i32_0 : i32, i32
  }
  func.func @transform_3(%arg0: i32) -> (i32, i32) {
    %c0_i32 = arith.constant 0 : i32
    %c0_i32_0 = arith.constant 0 : i32
    return %arg0, %c0_i32 : i32, i32
  }
}

module attributes {stable_mosaic.version = 11 : i64} {
  func.func @_conv_mm_kernel(%arg0: i32, %arg1: memref<8x32xf32, #tpu.memory_space<vmem>>, %arg2: memref<32x128xf32, #tpu.memory_space<vmem>>, %arg3: memref<1x128xf32, #tpu.memory_space<vmem>>, %arg4: memref<8x128xf32, #tpu.memory_space<vmem>>) attributes {dimension_semantics = [#tpu.dimension_semantics<parallel>], iteration_bounds = array<i64: 2>, scalar_prefetch = 0 : i64, scratch_operands = 0 : i64, tpu.core_type = #tpu.core_type<tc>, window_params = [{transform_indices = @transform_0, window_bounds = array<i64: 8, 32>}, {pipeline_mode = #tpu.pipeline_mode<synchronous>, transform_indices = @transform_1, window_bounds = array<i64: 32, 128>}, {pipeline_mode = #tpu.pipeline_mode<synchronous>, transform_indices = @transform_2, window_bounds = array<i64: 1, 128>}, {transform_indices = @transform_3, window_bounds = array<i64: 8, 128>}]} {
    %c0 = arith.constant 0 : index
    %c0_0 = arith.constant 0 : index
    %0 = vector.load %arg1[%c0, %c0_0] : memref<8x32xf32, #tpu.memory_space<vmem>>, vector<8x32xf32>
    %c0_1 = arith.constant 0 : index
    %c0_2 = arith.constant 0 : index
    %1 = vector.load %arg2[%c0_1, %c0_2] : memref<32x128xf32, #tpu.memory_space<vmem>>, vector<32x128xf32>
    %cst = arith.constant dense<0.000000e+00> : vector<8x128xf32>
    %2 = tpu.matmul %0, %1, %cst {dimension_numbers = #tpu.dot_dimension_numbers<[1], [0], [0], [1], [0, 0, 1, 1], [], []>} : vector<8x32xf32>, vector<32x128xf32>, vector<8x128xf32> -> vector<8x128xf32>
    %c0_3 = arith.constant 0 : index
    %c0_4 = arith.constant 0 : index
    %3 = vector.load %arg3[%c0_3, %c0_4] : memref<1x128xf32, #tpu.memory_space<vmem>>, vector<1x128xf32>
    %4 = vector.broadcast %3 : vector<1x128xf32> to vector<8x128xf32>
    %5 = arith.addf %2, %4 : vector<8x128xf32>
    %cst_5 = arith.constant 0.000000e+00 : f32
    %6 = vector.broadcast %cst_5 : f32 to vector<8x128xf32>
    %7 = arith.cmpf ogt, %5, %6 : vector<8x128xf32>
    %cst_6 = arith.constant 1.000000e-01 : f32
    %8 = vector.broadcast %cst_6 : f32 to vector<8x128xf32>
    %9 = arith.mulf %8, %5 : vector<8x128xf32>
    %10 = arith.select %7, %5, %9 : vector<8x128xi1>, vector<8x128xf32>
    %c0_7 = arith.constant 0 : index
    %c0_8 = arith.constant 0 : index
    %11 = vector.load %arg4[%c0_7, %c0_8] : memref<8x128xf32, #tpu.memory_space<vmem>>, vector<8x128xf32>
    tpu.vector_store %arg4[%c0_7, %c0_8], %10 {strides = array<i32>} : memref<8x128xf32, #tpu.memory_space<vmem>>, vector<8x128xf32>,
    return
  }
  func.func @transform_0(%arg0: i32) -> (i32, i32) {
    %c0_i32 = arith.constant 0 : i32
    %c0_i32_0 = arith.constant 0 : i32
    return %arg0, %c0_i32 : i32, i32
  }
  func.func @transform_1(%arg0: i32) -> (i32, i32) {
    %c0_i32 = arith.constant 0 : i32
    %c0_i32_0 = arith.constant 0 : i32
    %c0_i32_1 = arith.constant 0 : i32
    return %c0_i32, %c0_i32_0 : i32, i32
  }
  func.func @transform_2(%arg0: i32) -> (i32, i32) {
    %c0_i32 = arith.constant 0 : i32
    %c0_i32_0 = arith.constant 0 : i32
    %c0_i32_1 = arith.constant 0 : i32
    return %c0_i32, %c0_i32_0 : i32, i32
  }
  func.func @transform_3(%arg0: i32) -> (i32, i32) {
    %c0_i32 = arith.constant 0 : i32
    %c0_i32_0 = arith.constant 0 : i32
    return %arg0, %c0_i32 : i32, i32
  }
}

</mosaic_0001>

<llo_original>
// kernel: tpu_custom_call.1
$region0: #{tpu_custom_call.1}
  #allocation0 [shape = 'u32[]', space=smem, size = 0x4, offset = 0x4, fixed_abs, tag = 'smem constant byte address 0x4 - core index']
  #allocation1 [shape = 'u32[144,128]{1,0:T(1,128)}', space=vmem, size = 0x12000, scoped, tag = 'internal scratch']
  %s0 = inlined_call_operand.hbm [shape: f32[16,32], index: 0, kind: input, shape index: {}]
  %s1 = inlined_call_operand.hbm [shape: f32[32,128], index: 1, kind: input, shape index: {}]
  %s2 = inlined_call_operand.vmem [shape: f32[1,128], index: 2, kind: input, shape index: {}]
  %s3 = inlined_call_operand.hbm [shape: f32[16,128], index: 3, kind: output, shape index: {}]
  %s4 = sld [smem:[#allocation0]]
  $region53: #{tpu_custom_call.1} parent=0
    _
  %s6 = ssub.s32 1, %s4
  %s7 = scalar_select 0, %s6, %s4
  $region1: #{tpu_custom_call.1} parent=0
    #allocation2 [shape = 'u8[8192]{0}', space=vmem, size = 0x2000, scoped, tag = 'input window, operand 0']
    #allocation3 [shape = 's32[2]{0}', space=sflag, size = 0x8, scoped, tag = 'scoped memory for tpu_custom_call.1']
    #allocation4 [shape = 's32[2]{0}', space=sflag, size = 0x8, scoped, tag = 'scoped memory for tpu_custom_call.1']
    #allocation5 [shape = 'u8[16384]{0}', space=vmem, size = 0x4000, scoped, tag = 'input window, operand 1, single buffered']
    #allocation6 [shape = 's32[1]{0}', space=sflag, size = 0x4, scoped, tag = 'scoped memory for tpu_custom_call.1']
    #allocation7 [shape = 'u8[8192]{0}', space=vmem, size = 0x2000, scoped, tag = 'output window, operand 0']
    %8 = vsyncpa [#allocation3], 0
    %s9 = scalar_lea.sflag [#allocation3], 1
    %10 = vsyncpa %s9, 0
    %11 = vsyncpa [#allocation6], 0
    %12 = vsyncpa [#allocation4], 0
    %s13 = scalar_lea.sflag [#allocation4], 1
    %14 = vsyncpa %s13, 0
    loop: start=0, step=1, limit=4
    $region2: #{tpu_custom_call.1} parent=1 // loop_pre_header
      _
    $region3: #{tpu_custom_call.1} parent=1 // loop_header
      %s16 = sphi 0, %s20
      %p17 = scmp.ge.s32.totalorder %s16, 4
      %s26 = sphi 0, %s28
      %s29 = sphi 0, %s26
      %s30 = sphi 0, %s29
      %s46 = sphi 0, %s30
      %s50 = sphi 0, %s50
      %s52 = sphi 0, %s50
      %s53 = sphi 0, %s52
      %s67 = sphi 0, %s53
      %s71 = sphi 0, %s71
      %s73 = sphi 0, %s71
      %s74 = sphi 0, %s73
      %s88 = sphi 0, %s74
      %s94 = sphi 0, %s96
      %s97 = sphi 0, %s94
      %s98 = sphi 0, %s97
      %s114 = sphi 0, %s98
    $region4: #{tpu_custom_call.1} parent=1 // loop_header_branch
      %19 = sbr.rel (%p17) target = $region8
    $region5: #{tpu_custom_call.1} parent=1 // loop_body
      %s21 = ssub.s32 %s16, 1
      %s22 = ssub.s32 %s16, 2
      %s23 = sadd.s32 %s16, 1
      %s24 = ssub.s32 %s16, %s23
      %p25 = scmp.eq.s32.totalorder %s24, 0
      %s27 = sadd.s32 %s26, 1
      %s28 = scalar_select %p25, %s26, %s27
      %p31 = pneg %p25
      %p32 = scmp.eq.s32.totalorder %s16, 1
      %p33 = por %p31, %p32
      %p34 = scmp.ne.s32.totalorder %s26, %s29
      %p35 = scmp.eq.s32.totalorder %s16, 0
      %p36 = por %p34, %p35
      %p37 = scmp.ne.s32.totalorder %s26, %s29
      %p38 = scmp.eq.s32.totalorder %s21, 1
      %p39 = por %p37, %p38
      %p40 = scmp.ne.s32.totalorder %s29, %s30
      %p41 = scmp.eq.s32.totalorder %s21, 0
      %p42 = por %p40, %p41
      %p43 = scmp.ne.s32.totalorder %s29, %s30
      %p44 = scmp.eq.s32.totalorder %s22, 1
      %p45 = por %p43, %p44
      %p47 = scmp.ne.s32.totalorder %s30, %s46
      %p48 = scmp.eq.s32.totalorder %s22, 0
      %p49 = por %p47, %p48
      %s51 = sadd.s32 %s50, 1
      %p54 = scmp.eq.s32.totalorder %s16, 1
      %p55 = scmp.ne.s32.totalorder %s50, %s52
      %p56 = scmp.eq.s32.totalorder %s16, 0
      %p57 = por %p55, %p56
      %p58 = scmp.ne.s32.totalorder %s50, %s52
      %p59 = scmp.eq.s32.totalorder %s21, 1
      %p60 = por %p58, %p59
      %p61 = scmp.ne.s32.totalorder %s52, %s53
      %p62 = scmp.eq.s32.totalorder %s21, 0
      %p63 = por %p61, %p62
      %p64 = scmp.ne.s32.totalorder %s52, %s53
      %p65 = scmp.eq.s32.totalorder %s22, 1
      %p66 = por %p64, %p65
      %p68 = scmp.ne.s32.totalorder %s53, %s67
      %p69 = scmp.eq.s32.totalorder %s22, 0
      %p70 = por %p68, %p69
      %s72 = sadd.s32 %s71, 1
      %p75 = scmp.eq.s32.totalorder %s16, 1
      %p76 = scmp.ne.s32.totalorder %s71, %s73
      %p77 = scmp.eq.s32.totalorder %s16, 0
      %p78 = por %p76, %p77
      %p79 = scmp.ne.s32.totalorder %s71, %s73
      %p80 = scmp.eq.s32.totalorder %s21, 1
      %p81 = por %p79, %p80
      %p82 = scmp.ne.s32.totalorder %s73, %s74
      %p83 = scmp.eq.s32.totalorder %s21, 0
      %p84 = por %p82, %p83
      %p85 = scmp.ne.s32.totalorder %s73, %s74
      %p86 = scmp.eq.s32.totalorder %s22, 1
      %p87 = por %p85, %p86
      %p89 = scmp.ne.s32.totalorder %s74, %s88
      %p90 = scmp.eq.s32.totalorder %s22, 0
      %p91 = por %p89, %p90
      %s92 = ssub.s32 %s16, %s23
      %p93 = scmp.eq.s32.totalorder %s92, 0
      %s95 = sadd.s32 %s94, 1
      %s96 = scalar_select %p93, %s94, %s95
      %p99 = pneg %p93
      %p100 = scmp.eq.s32.totalorder %s16, 1
      %p101 = por %p99, %p100
      %p102 = scmp.ne.s32.totalorder %s94, %s97
      %p103 = scmp.eq.s32.totalorder %s16, 0
      %p104 = por %p102, %p103
      %p105 = scmp.ne.s32.totalorder %s94, %s97
      %p106 = scmp.eq.s32.totalorder %s21, 1
      %p107 = por %p105, %p106
      %p108 = scmp.ne.s32.totalorder %s97, %s98
      %p109 = scmp.eq.s32.totalorder %s21, 0
      %p110 = por %p108, %p109
      %p111 = scmp.ne.s32.totalorder %s97, %s98
      %p112 = scmp.eq.s32.totalorder %s22, 1
      %p113 = por %p111, %p112
      %p115 = scmp.ne.s32.totalorder %s98, %s114
      %p116 = scmp.eq.s32.totalorder %s22, 0
      %p117 = por %p115, %p116
      %p118 = scmp.le.s32.totalorder 1, %s16
      %p119 = scmp.lt.s32.totalorder %s16, 3
      %p120 = pnand %p118, %p119
      %p121 = pneg %p120
      // Predicated region
      $region9: #{tpu_custom_call.1} parent=5 // pred_check
        _
      $region10: #{tpu_custom_call.1} parent=5 // pred_check_branch
        %123 = sbr.rel (%p120) target = $region12
      $region11: #{tpu_custom_call.1} parent=5 // pred_region
        %s124 = ssub.s32 %s16, 1
        // Predicated region
        $region13: #{tpu_custom_call.1} parent=11 // pred_check
          %p125 = pneg %p63
        $region14: #{tpu_custom_call.1} parent=11 // pred_check_branch
          %127 = sbr.rel (%p125) target = $region16
        $region15: #{tpu_custom_call.1} parent=11 // pred_region
          %s129 = ssub.s32 512, 512
          %130 = vsyncadd [#allocation6], %s129
          %s131 = sshll.u32 [#allocation5], 4
          %s132 = int_to_ptr.vmem [resolvable:$true] %s131
          %137 = dma.hbm_to_vmem [thread:$0]  %s1, 512, %s132, [#allocation6], 128, 128, 8
        $region16: #{tpu_custom_call.1} parent=11 // pred_fallthru
          _
        // Predicated region
        $region17: #{tpu_custom_call.1} parent=11 // pred_check
          %p138 = pneg %p84
        $region18: #{tpu_custom_call.1} parent=11 // pred_check_branch
          %140 = sbr.rel (%p138) target = $region20
        $region19: #{tpu_custom_call.1} parent=11 // pred_region
          _
        $region20: #{tpu_custom_call.1} parent=11 // pred_fallthru
          _
      $region12: #{tpu_custom_call.1} parent=5 // pred_fallthru
        _
      %p141 = scmp.lt.s32.totalorder %s16, 2
      // Predicated region
      $region21: #{tpu_custom_call.1} parent=5 // pred_check
        %p142 = pneg %p141
      $region22: #{tpu_custom_call.1} parent=5 // pred_check_branch
        %144 = sbr.rel (%p142) target = $region24
      $region23: #{tpu_custom_call.1} parent=5 // pred_region
        // Predicated region
        $region25: #{tpu_custom_call.1} parent=23 // pred_check
          %p145 = pneg %p36
        $region26: #{tpu_custom_call.1} parent=23 // pred_check_branch
          %147 = sbr.rel (%p145) target = $region28
        $region27: #{tpu_custom_call.1} parent=23 // pred_region
          %s148 = sand.u32 %s26, 1
          %s149 = scalar_lea.sflag [#allocation3], %s148
          %s150 = sand.u32 %s26, 1
          %s151 = smul.addr %s150, 8
          %s152 = scalar_lea.vmem [#allocation2], %s151
          %s154 = ssub.s32 128, 128
          %155 = vsyncadd %s149, %s154
          %s156 = smul.addr %s16, 128
          %s157 = scalar_lea.hbm %s0, %s156
          %s159 = sshll.u32 %s152, 4
          %s160 = int_to_ptr.vmem [resolvable:$true] %s159
          %162 = dma.hbm_to_vmem [thread:$0]  %s157, 128, %s160, %s149
        $region28: #{tpu_custom_call.1} parent=23 // pred_fallthru
          _
      $region24: #{tpu_custom_call.1} parent=5 // pred_fallthru
        _
      %p163 = scmp.le.s32.totalorder 1, %s16
      %p164 = scmp.lt.s32.totalorder %s16, 3
      %p165 = pnand %p163, %p164
      %p166 = pneg %p165
      // Predicated region
      $region29: #{tpu_custom_call.1} parent=5 // pred_check
        _
      $region30: #{tpu_custom_call.1} parent=5 // pred_check_branch
        %168 = sbr.rel (%p165) target = $region32
      $region31: #{tpu_custom_call.1} parent=5 // pred_region
        %s169 = ssub.s32 %s16, 1
        %s170 = sand.u32 %s29, 1
        %s171 = scalar_lea.sflag [#allocation3], %s170
        %s172 = sand.u32 %s29, 1
        %s173 = smul.addr %s172, 8
        %s174 = scalar_lea.vmem [#allocation2], %s173
        // Predicated region
        $region33: #{tpu_custom_call.1} parent=31 // pred_check
          %p175 = pneg %p42
        $region34: #{tpu_custom_call.1} parent=31 // pred_check_branch
          %177 = sbr.rel (%p175) target = $region36
        $region35: #{tpu_custom_call.1} parent=31 // pred_region
          %178 = dma.done %s171, 128
        $region36: #{tpu_custom_call.1} parent=31 // pred_fallthru
          _
        // Predicated region
        $region37: #{tpu_custom_call.1} parent=31 // pred_check
          %p179 = pneg %p63
        $region38: #{tpu_custom_call.1} parent=31 // pred_check_branch
          %181 = sbr.rel (%p179) target = $region40
        $region39: #{tpu_custom_call.1} parent=31 // pred_region
          %182 = dma.done [#allocation6], 512
        $region40: #{tpu_custom_call.1} parent=31 // pred_fallthru
          _
        %s183 = sand.u32 %s29, 1
        %s184 = scalar_lea.sflag [#allocation3], %s183
        %s185 = sand.u32 %s29, 1
        %s186 = smul.addr %s185, 8
        %s187 = scalar_lea.vmem [#allocation2], %s186
        %p188 = pneg %p42
        %p189 = pneg %p39
        %p190 = pneg %p63
        %p191 = pneg %p60
        %p192 = pneg %p84
        %p193 = pneg %p81
        %p194 = pneg %p110
        %p195 = pneg %p107
        %s196 = sand.u32 %s97, 1
        %s197 = scalar_lea.sflag [#allocation4], %s196
        %s198 = sand.u32 %s97, 1
        %s199 = smul.addr %s198, 8
        %s200 = scalar_lea.vmem [#allocation7], %s199
        %v201 = vld [vmem:[%s174] sm:$0xff]
        %v202 = vld [vmem:[#allocation5] sm:$0xff]
        %v203 = vld [vmem:[#allocation5 + $0x8] sm:$0xff]
        %v204 = vld [vmem:[#allocation5 + $0x10] sm:$0xff]
        %v205 = vld [vmem:[#allocation5 + $0x18] sm:$0xff]
        %v206 = vld [vmem:[%s2] sm:$0x1]
        %v208 = vlaneseq
        %v209 = vshrl.u32 %v208, 7
        %v210 = vsub.s32 0, %v209
        %v211 = vrot.slane %v206, %v210
        %vm213 = vcmask 261120
        %v215 = vsel %vm213, %v201, 0
        %217 = vmatprep.subr.mxu0 0.0
        %218 = vmatpush1.msra.mxu0 0.0
        %219 = vmatprep.subr.mxu0 0.0
        %220 = vmatpush1.msra.mxu0 0.0
        %221 = vmatprep.subr.mxu0 0.0
        %222 = vmatpush1.msra.mxu0 0.0
        %223 = vmatprep.subr.mxu0 0.0
        %224 = vmatpush1.msra.mxu0 0.0
        %225 = vmatprep.subr.mxu0 0.0
        %226 = vmatpush1.msra.mxu0 0.0
        %227 = vmatprep.subr.mxu0 0.0
        %228 = vmatpush1.msra.mxu0 0.0
        %229 = vmatprep.subr.mxu0 0.0
        %230 = vmatpush1.msra.mxu0 0.0
        %231 = vmatprep.subr.mxu0 0.0
        %232 = vmatpush1.msra.mxu0 0.0
        %233 = vmatprep.subr.mxu0 0.0
        %234 = vmatpush1.msra.mxu0 0.0
        %235 = vmatprep.subr.mxu0 0.0
        %236 = vmatpush1.msra.mxu0 0.0
        %237 = vmatprep.subr.mxu0 0.0
        %238 = vmatpush1.msra.mxu0 0.0
        %239 = vmatprep.subr.mxu0 0.0
        %240 = vmatpush1.msra.mxu0 0.0
        %241 = vmatprep.subr.mxu0 0.0
        %242 = vmatpush1.msra.mxu0 %v205
        %243 = vmatprep.subr.mxu0 0.0
        %244 = vmatpush1.msra.mxu0 %v204
        %245 = vmatprep.subr.mxu0 0.0
        %246 = vmatpush1.msra.mxu0 %v203
        %247 = vmatprep.subr.mxu0 0.0
        %248 = vmatpush1.msra.mxu0 %v202
        %249 = vmatprep.subr.mxu0 0.0
        %250 = vmatpush2.msra.mxu0 0.0
        %251 = vmatprep.subr.mxu0 0.0
        %252 = vmatpush2.msra.mxu0 0.0
        %253 = vmatprep.subr.mxu0 0.0
        %254 = vmatpush2.msra.mxu0 0.0
        %255 = vmatprep.subr.mxu0 0.0
        %256 = vmatpush2.msra.mxu0 0.0
        %257 = vmatprep.subr.mxu0 0.0
        %258 = vmatpush2.msra.mxu0 0.0
        %259 = vmatprep.subr.mxu0 0.0
        %260 = vmatpush2.msra.mxu0 0.0
        %261 = vmatprep.subr.mxu0 0.0
        %262 = vmatpush2.msra.mxu0 0.0
        %263 = vmatprep.subr.mxu0 0.0
        %264 = vmatpush2.msra.mxu0 0.0
        %265 = vmatprep.subr.mxu0 0.0
        %266 = vmatpush2.msra.mxu0 0.0
        %267 = vmatprep.subr.mxu0 0.0
        %268 = vmatpush2.msra.mxu0 0.0
        %269 = vmatprep.subr.mxu0 0.0
        %270 = vmatpush2.msra.mxu0 0.0
        %271 = vmatprep.subr.mxu0 0.0
        %272 = vmatpush2.msra.mxu0 0.0
        %273 = vmatprep.subr.mxu0 0.0
        %274 = vmatpush2.msra.mxu0 0.0
        %275 = vmatprep.subr.mxu0 0.0
        %276 = vmatpush2.msra.mxu0 0.0
        %277 = vmatprep.subr.mxu0 0.0
        %278 = vmatpush2.msra.mxu0 0.0
        %279 = vmatprep.subr.mxu0 0.0
        %280 = vmatpush2.msra.mxu0 0.0
        %281 = vmatprep.mubr.f32.mxu0 0.0
        %282 = vmatmul.mubr.f32.gmra.mxu0 %v215
        %v283 = vpop.f32.mrf.mxu0
        %v284 = vadd.f32 %v211, %v283
        %v285 = vpop.f32.mrf.mxu0
        %286 = vdwg.mxu0
        %vm287 = vcmp.gt.f32.partialorder %v284, 0.0
        %v288 = vmul.f32 %v284, 0.1
        %v289 = vsel %vm287, %v284, %v288
        %290 = vst [vmem:[%s200] sm:$0xff] %v289
        %s291 = sand.u32 %s97, 1
        %s292 = scalar_lea.sflag [#allocation4], %s291
        %s293 = sand.u32 %s97, 1
        %s294 = smul.addr %s293, 8
        %s295 = scalar_lea.vmem [#allocation7], %s294
        // Predicated region
        $region41: #{tpu_custom_call.1} parent=31 // pred_check
          %p296 = pneg %p107
        $region42: #{tpu_custom_call.1} parent=31 // pred_check_branch
          %298 = sbr.rel (%p296) target = $region44
        $region43: #{tpu_custom_call.1} parent=31 // pred_region
          %s300 = ssub.s32 128, 128
          %301 = vsyncadd %s292, %s300
          %s302 = smul.addr %s21, 128
          %s303 = scalar_lea.hbm %s3, %s302
          %s305 = sshll.u32 %s295, 4
          %s306 = int_to_ptr.vmem [resolvable:$true] %s305
          %308 = dma.vmem_to_hbm [thread:$0]  %s306, 128, %s303, %s292
        $region44: #{tpu_custom_call.1} parent=31 // pred_fallthru
          _
      $region32: #{tpu_custom_call.1} parent=5 // pred_fallthru
        _
      %p309 = scmp.le.s32.totalorder 2, %s16
      // Predicated region
      $region45: #{tpu_custom_call.1} parent=5 // pred_check
        %p310 = pneg %p309
      $region46: #{tpu_custom_call.1} parent=5 // pred_check_branch
        %312 = sbr.rel (%p310) target = $region48
      $region47: #{tpu_custom_call.1} parent=5 // pred_region
        %s313 = ssub.s32 %s16, 2
        // Predicated region
        $region49: #{tpu_custom_call.1} parent=47 // pred_check
          %p314 = pneg %p113
        $region50: #{tpu_custom_call.1} parent=47 // pred_check_branch
          %316 = sbr.rel (%p314) target = $region52
        $region51: #{tpu_custom_call.1} parent=47 // pred_region
          %s317 = sand.u32 %s98, 1
          %s318 = scalar_lea.sflag [#allocation4], %s317
          %s319 = sand.u32 %s98, 1
          %s320 = smul.addr %s319, 8
          %s321 = scalar_lea.vmem [#allocation7], %s320
          %322 = dma.done %s318, 128
        $region52: #{tpu_custom_call.1} parent=47 // pred_fallthru
          _
      $region48: #{tpu_custom_call.1} parent=5 // pred_fallthru
        _
    $region6: #{tpu_custom_call.1} parent=1 // loop_footer
      %s20 = sadd.s32 1, %s16
    $region7: #{tpu_custom_call.1} parent=1 // loop_footer_branch
      %15 = sbr.rel target = $region3
    $region8: #{tpu_custom_call.1} parent=1 // loop_exit
      _
    %323 = vsyncpa [#allocation3], 1
    %s324 = scalar_lea.sflag [#allocation3], 1
    %325 = vsyncpa %s324, 1
    %326 = vsyncpa [#allocation6], 1
    %327 = vsyncpa [#allocation4], 1
    %s328 = scalar_lea.sflag [#allocation4], 1
    %329 = vsyncpa %s328, 1

// kernel: tpu_custom_call.1
$region0: #{tpu_custom_call.1}
  #allocation0 [shape = 'u32[]', space=smem, size = 0x4, offset = 0x4, fixed_abs, tag = 'smem constant byte address 0x4 - core index']
  #allocation1 [shape = 'u32[144,128]{1,0:T(1,128)}', space=vmem, size = 0x12000, scoped, tag = 'internal scratch']
  %s0 = inlined_call_operand.hbm [shape: f32[16,32], index: 0, kind: input, shape index: {}]
  %s1 = inlined_call_operand.hbm [shape: f32[32,128], index: 1, kind: input, shape index: {}]
  %s2 = inlined_call_operand.vmem [shape: f32[1,128], index: 2, kind: input, shape index: {}]
  %s3 = inlined_call_operand.hbm [shape: f32[16,128], index: 3, kind: output, shape index: {}]
  %s4 = sld [smem:[#allocation0]]
  $region53: #{tpu_custom_call.1} parent=0
    _
  %s6 = ssub.s32 1, %s4
  %s7 = scalar_select 0, %s6, %s4
  $region1: #{tpu_custom_call.1} parent=0
    #allocation2 [shape = 'u8[8192]{0}', space=vmem, size = 0x2000, scoped, tag = 'input window, operand 0']
    #allocation3 [shape = 's32[2]{0}', space=sflag, size = 0x8, scoped, tag = 'scoped memory for tpu_custom_call.1']
    #allocation4 [shape = 's32[2]{0}', space=sflag, size = 0x8, scoped, tag = 'scoped memory for tpu_custom_call.1']
    #allocation5 [shape = 'u8[16384]{0}', space=vmem, size = 0x4000, scoped, tag = 'input window, operand 1, single buffered']
    #allocation6 [shape = 's32[1]{0}', space=sflag, size = 0x4, scoped, tag = 'scoped memory for tpu_custom_call.1']
    #allocation7 [shape = 'u8[8192]{0}', space=vmem, size = 0x2000, scoped, tag = 'output window, operand 0']
    %8 = vsyncpa [#allocation3], 0
    %s9 = scalar_lea.sflag [#allocation3], 1
    %10 = vsyncpa %s9, 0
    %11 = vsyncpa [#allocation6], 0
    %12 = vsyncpa [#allocation4], 0
    %s13 = scalar_lea.sflag [#allocation4], 1
    %14 = vsyncpa %s13, 0
    loop: start=0, step=1, limit=4
    $region2: #{tpu_custom_call.1} parent=1 // loop_pre_header
      _
    $region3: #{tpu_custom_call.1} parent=1 // loop_header
      %s16 = sphi 0, %s20
      %p17 = scmp.ge.s32.totalorder %s16, 4
      %s26 = sphi 0, %s28
      %s29 = sphi 0, %s26
      %s30 = sphi 0, %s29
      %s46 = sphi 0, %s30
      %s50 = sphi 0, %s50
      %s52 = sphi 0, %s50
      %s53 = sphi 0, %s52
      %s67 = sphi 0, %s53
      %s71 = sphi 0, %s71
      %s73 = sphi 0, %s71
      %s74 = sphi 0, %s73
      %s88 = sphi 0, %s74
      %s94 = sphi 0, %s96
      %s97 = sphi 0, %s94
      %s98 = sphi 0, %s97
      %s114 = sphi 0, %s98
    $region4: #{tpu_custom_call.1} parent=1 // loop_header_branch
      %19 = sbr.rel (%p17) target = $region8
    $region5: #{tpu_custom_call.1} parent=1 // loop_body
      %s21 = ssub.s32 %s16, 1
      %s22 = ssub.s32 %s16, 2
      %s23 = sadd.s32 %s16, 1
      %s24 = ssub.s32 %s16, %s23
      %p25 = scmp.eq.s32.totalorder %s24, 0
      %s27 = sadd.s32 %s26, 1
      %s28 = scalar_select %p25, %s26, %s27
      %p31 = pneg %p25
      %p32 = scmp.eq.s32.totalorder %s16, 1
      %p33 = por %p31, %p32
      %p34 = scmp.ne.s32.totalorder %s26, %s29
      %p35 = scmp.eq.s32.totalorder %s16, 0
      %p36 = por %p34, %p35
      %p37 = scmp.ne.s32.totalorder %s26, %s29
      %p38 = scmp.eq.s32.totalorder %s21, 1
      %p39 = por %p37, %p38
      %p40 = scmp.ne.s32.totalorder %s29, %s30
      %p41 = scmp.eq.s32.totalorder %s21, 0
      %p42 = por %p40, %p41
      %p43 = scmp.ne.s32.totalorder %s29, %s30
      %p44 = scmp.eq.s32.totalorder %s22, 1
      %p45 = por %p43, %p44
      %p47 = scmp.ne.s32.totalorder %s30, %s46
      %p48 = scmp.eq.s32.totalorder %s22, 0
      %p49 = por %p47, %p48
      %s51 = sadd.s32 %s50, 1
      %p54 = scmp.eq.s32.totalorder %s16, 1
      %p55 = scmp.ne.s32.totalorder %s50, %s52
      %p56 = scmp.eq.s32.totalorder %s16, 0
      %p57 = por %p55, %p56
      %p58 = scmp.ne.s32.totalorder %s50, %s52
      %p59 = scmp.eq.s32.totalorder %s21, 1
      %p60 = por %p58, %p59
      %p61 = scmp.ne.s32.totalorder %s52, %s53
      %p62 = scmp.eq.s32.totalorder %s21, 0
      %p63 = por %p61, %p62
      %p64 = scmp.ne.s32.totalorder %s52, %s53
      %p65 = scmp.eq.s32.totalorder %s22, 1
      %p66 = por %p64, %p65
      %p68 = scmp.ne.s32.totalorder %s53, %s67
      %p69 = scmp.eq.s32.totalorder %s22, 0
      %p70 = por %p68, %p69
      %s72 = sadd.s32 %s71, 1
      %p75 = scmp.eq.s32.totalorder %s16, 1
      %p76 = scmp.ne.s32.totalorder %s71, %s73
      %p77 = scmp.eq.s32.totalorder %s16, 0
      %p78 = por %p76, %p77
      %p79 = scmp.ne.s32.totalorder %s71, %s73
      %p80 = scmp.eq.s32.totalorder %s21, 1
      %p81 = por %p79, %p80
      %p82 = scmp.ne.s32.totalorder %s73, %s74
      %p83 = scmp.eq.s32.totalorder %s21, 0
      %p84 = por %p82, %p83
      %p85 = scmp.ne.s32.totalorder %s73, %s74
      %p86 = scmp.eq.s32.totalorder %s22, 1
      %p87 = por %p85, %p86
      %p89 = scmp.ne.s32.totalorder %s74, %s88
      %p90 = scmp.eq.s32.totalorder %s22, 0
      %p91 = por %p89, %p90
      %s92 = ssub.s32 %s16, %s23
      %p93 = scmp.eq.s32.totalorder %s92, 0
      %s95 = sadd.s32 %s94, 1
      %s96 = scalar_select %p93, %s94, %s95
      %p99 = pneg %p93
      %p100 = scmp.eq.s32.totalorder %s16, 1
      %p101 = por %p99, %p100
      %p102 = scmp.ne.s32.totalorder %s94, %s97
      %p103 = scmp.eq.s32.totalorder %s16, 0
      %p104 = por %p102, %p103
      %p105 = scmp.ne.s32.totalorder %s94, %s97
      %p106 = scmp.eq.s32.totalorder %s21, 1
      %p107 = por %p105, %p106
      %p108 = scmp.ne.s32.totalorder %s97, %s98
      %p109 = scmp.eq.s32.totalorder %s21, 0
      %p110 = por %p108, %p109
      %p111 = scmp.ne.s32.totalorder %s97, %s98
      %p112 = scmp.eq.s32.totalorder %s22, 1
      %p113 = por %p111, %p112
      %p115 = scmp.ne.s32.totalorder %s98, %s114
      %p116 = scmp.eq.s32.totalorder %s22, 0
      %p117 = por %p115, %p116
      %p118 = scmp.le.s32.totalorder 1, %s16
      %p119 = scmp.lt.s32.totalorder %s16, 3
      %p120 = pnand %p118, %p119
      %p121 = pneg %p120
      // Predicated region
      $region9: #{tpu_custom_call.1} parent=5 // pred_check
        _
      $region10: #{tpu_custom_call.1} parent=5 // pred_check_branch
        %123 = sbr.rel (%p120) target = $region12
      $region11: #{tpu_custom_call.1} parent=5 // pred_region
        %s124 = ssub.s32 %s16, 1
        // Predicated region
        $region13: #{tpu_custom_call.1} parent=11 // pred_check
          %p125 = pneg %p63
        $region14: #{tpu_custom_call.1} parent=11 // pred_check_branch
          %127 = sbr.rel (%p125) target = $region16
        $region15: #{tpu_custom_call.1} parent=11 // pred_region
          %s129 = ssub.s32 512, 512
          %130 = vsyncadd [#allocation6], %s129
          %s131 = sshll.u32 [#allocation5], 4
          %s132 = int_to_ptr.vmem [resolvable:$true] %s131
          %137 = dma.hbm_to_vmem [thread:$0]  %s1, 512, %s132, [#allocation6], 128, 128, 8
        $region16: #{tpu_custom_call.1} parent=11 // pred_fallthru
          _
        // Predicated region
        $region17: #{tpu_custom_call.1} parent=11 // pred_check
          %p138 = pneg %p84
        $region18: #{tpu_custom_call.1} parent=11 // pred_check_branch
          %140 = sbr.rel (%p138) target = $region20
        $region19: #{tpu_custom_call.1} parent=11 // pred_region
          _
        $region20: #{tpu_custom_call.1} parent=11 // pred_fallthru
          _
      $region12: #{tpu_custom_call.1} parent=5 // pred_fallthru
        _
      %p141 = scmp.lt.s32.totalorder %s16, 2
      // Predicated region
      $region21: #{tpu_custom_call.1} parent=5 // pred_check
        %p142 = pneg %p141
      $region22: #{tpu_custom_call.1} parent=5 // pred_check_branch
        %144 = sbr.rel (%p142) target = $region24
      $region23: #{tpu_custom_call.1} parent=5 // pred_region
        // Predicated region
        $region25: #{tpu_custom_call.1} parent=23 // pred_check
          %p145 = pneg %p36
        $region26: #{tpu_custom_call.1} parent=23 // pred_check_branch
          %147 = sbr.rel (%p145) target = $region28
        $region27: #{tpu_custom_call.1} parent=23 // pred_region
          %s148 = sand.u32 %s26, 1
          %s149 = scalar_lea.sflag [#allocation3], %s148
          %s150 = sand.u32 %s26, 1
          %s151 = smul.addr %s150, 8
          %s152 = scalar_lea.vmem [#allocation2], %s151
          %s154 = ssub.s32 128, 128
          %155 = vsyncadd %s149, %s154
          %s156 = smul.addr %s16, 128
          %s157 = scalar_lea.hbm %s0, %s156
          %s159 = sshll.u32 %s152, 4
          %s160 = int_to_ptr.vmem [resolvable:$true] %s159
          %162 = dma.hbm_to_vmem [thread:$0]  %s157, 128, %s160, %s149
        $region28: #{tpu_custom_call.1} parent=23 // pred_fallthru
          _
      $region24: #{tpu_custom_call.1} parent=5 // pred_fallthru
        _
      %p163 = scmp.le.s32.totalorder 1, %s16
      %p164 = scmp.lt.s32.totalorder %s16, 3
      %p165 = pnand %p163, %p164
      %p166 = pneg %p165
      // Predicated region
      $region29: #{tpu_custom_call.1} parent=5 // pred_check
        _
      $region30: #{tpu_custom_call.1} parent=5 // pred_check_branch
        %168 = sbr.rel (%p165) target = $region32
      $region31: #{tpu_custom_call.1} parent=5 // pred_region
        %s169 = ssub.s32 %s16, 1
        %s170 = sand.u32 %s29, 1
        %s171 = scalar_lea.sflag [#allocation3], %s170
        %s172 = sand.u32 %s29, 1
        %s173 = smul.addr %s172, 8
        %s174 = scalar_lea.vmem [#allocation2], %s173
        // Predicated region
        $region33: #{tpu_custom_call.1} parent=31 // pred_check
          %p175 = pneg %p42
        $region34: #{tpu_custom_call.1} parent=31 // pred_check_branch
          %177 = sbr.rel (%p175) target = $region36
        $region35: #{tpu_custom_call.1} parent=31 // pred_region
          %178 = dma.done %s171, 128
        $region36: #{tpu_custom_call.1} parent=31 // pred_fallthru
          _
        // Predicated region
        $region37: #{tpu_custom_call.1} parent=31 // pred_check
          %p179 = pneg %p63
        $region38: #{tpu_custom_call.1} parent=31 // pred_check_branch
          %181 = sbr.rel (%p179) target = $region40
        $region39: #{tpu_custom_call.1} parent=31 // pred_region
          %182 = dma.done [#allocation6], 512
        $region40: #{tpu_custom_call.1} parent=31 // pred_fallthru
          _
        %s183 = sand.u32 %s29, 1
        %s184 = scalar_lea.sflag [#allocation3], %s183
        %s185 = sand.u32 %s29, 1
        %s186 = smul.addr %s185, 8
        %s187 = scalar_lea.vmem [#allocation2], %s186
        %p188 = pneg %p42
        %p189 = pneg %p39
        %p190 = pneg %p63
        %p191 = pneg %p60
        %p192 = pneg %p84
        %p193 = pneg %p81
        %p194 = pneg %p110
        %p195 = pneg %p107
        %s196 = sand.u32 %s97, 1
        %s197 = scalar_lea.sflag [#allocation4], %s196
        %s198 = sand.u32 %s97, 1
        %s199 = smul.addr %s198, 8
        %s200 = scalar_lea.vmem [#allocation7], %s199
        %v201 = vld [vmem:[%s174] sm:$0xff]
        %v202 = vld [vmem:[#allocation5] sm:$0xff]
        %v203 = vld [vmem:[#allocation5 + $0x8] sm:$0xff]
        %v204 = vld [vmem:[#allocation5 + $0x10] sm:$0xff]
        %v205 = vld [vmem:[#allocation5 + $0x18] sm:$0xff]
        %v206 = vld [vmem:[%s2] sm:$0x1]
        %v208 = vlaneseq
        %v209 = vshrl.u32 %v208, 7
        %v210 = vsub.s32 0, %v209
        %v211 = vrot.slane %v206, %v210
        %vm213 = vcmask 261120
        %v215 = vsel %vm213, %v201, 0
        %217 = vmatprep.subr.mxu0 0.0
        %218 = vmatpush1.msra.mxu0 0.0
        %219 = vmatprep.subr.mxu0 0.0
        %220 = vmatpush1.msra.mxu0 0.0
        %221 = vmatprep.subr.mxu0 0.0
        %222 = vmatpush1.msra.mxu0 0.0
        %223 = vmatprep.subr.mxu0 0.0
        %224 = vmatpush1.msra.mxu0 0.0
        %225 = vmatprep.subr.mxu0 0.0
        %226 = vmatpush1.msra.mxu0 0.0
        %227 = vmatprep.subr.mxu0 0.0
        %228 = vmatpush1.msra.mxu0 0.0
        %229 = vmatprep.subr.mxu0 0.0
        %230 = vmatpush1.msra.mxu0 0.0
        %231 = vmatprep.subr.mxu0 0.0
        %232 = vmatpush1.msra.mxu0 0.0
        %233 = vmatprep.subr.mxu0 0.0
        %234 = vmatpush1.msra.mxu0 0.0
        %235 = vmatprep.subr.mxu0 0.0
        %236 = vmatpush1.msra.mxu0 0.0
        %237 = vmatprep.subr.mxu0 0.0
        %238 = vmatpush1.msra.mxu0 0.0
        %239 = vmatprep.subr.mxu0 0.0
        %240 = vmatpush1.msra.mxu0 0.0
        %241 = vmatprep.subr.mxu0 0.0
        %242 = vmatpush1.msra.mxu0 %v205
        %243 = vmatprep.subr.mxu0 0.0
        %244 = vmatpush1.msra.mxu0 %v204
        %245 = vmatprep.subr.mxu0 0.0
        %246 = vmatpush1.msra.mxu0 %v203
        %247 = vmatprep.subr.mxu0 0.0
        %248 = vmatpush1.msra.mxu0 %v202
        %249 = vmatprep.subr.mxu0 0.0
        %250 = vmatpush2.msra.mxu0 0.0
        %251 = vmatprep.subr.mxu0 0.0
        %252 = vmatpush2.msra.mxu0 0.0
        %253 = vmatprep.subr.mxu0 0.0
        %254 = vmatpush2.msra.mxu0 0.0
        %255 = vmatprep.subr.mxu0 0.0
        %256 = vmatpush2.msra.mxu0 0.0
        %257 = vmatprep.subr.mxu0 0.0
        %258 = vmatpush2.msra.mxu0 0.0
        %259 = vmatprep.subr.mxu0 0.0
        %260 = vmatpush2.msra.mxu0 0.0
        %261 = vmatprep.subr.mxu0 0.0
        %262 = vmatpush2.msra.mxu0 0.0
        %263 = vmatprep.subr.mxu0 0.0
        %264 = vmatpush2.msra.mxu0 0.0
        %265 = vmatprep.subr.mxu0 0.0
        %266 = vmatpush2.msra.mxu0 0.0
        %267 = vmatprep.subr.mxu0 0.0
        %268 = vmatpush2.msra.mxu0 0.0
        %269 = vmatprep.subr.mxu0 0.0
        %270 = vmatpush2.msra.mxu0 0.0
        %271 = vmatprep.subr.mxu0 0.0
        %272 = vmatpush2.msra.mxu0 0.0
        %273 = vmatprep.subr.mxu0 0.0
        %274 = vmatpush2.msra.mxu0 0.0
        %275 = vmatprep.subr.mxu0 0.0
        %276 = vmatpush2.msra.mxu0 0.0
        %277 = vmatprep.subr.mxu0 0.0
        %278 = vmatpush2.msra.mxu0 0.0
        %279 = vmatprep.subr.mxu0 0.0
        %280 = vmatpush2.msra.mxu0 0.0
        %281 = vmatprep.mubr.f32.mxu0 0.0
        %282 = vmatmul.mubr.f32.gmra.mxu0 %v215
        %v283 = vpop.f32.mrf.mxu0
        %v284 = vadd.f32 %v211, %v283
        %v285 = vpop.f32.mrf.mxu0
        %286 = vdwg.mxu0
        %vm287 = vcmp.gt.f32.partialorder %v284, 0.0
        %v288 = vmul.f32 %v284, 0.1
        %v289 = vsel %vm287, %v284, %v288
        %290 = vst [vmem:[%s200] sm:$0xff] %v289
        %s291 = sand.u32 %s97, 1
        %s292 = scalar_lea.sflag [#allocation4], %s291
        %s293 = sand.u32 %s97, 1
        %s294 = smul.addr %s293, 8
        %s295 = scalar_lea.vmem [#allocation7], %s294
        // Predicated region
        $region41: #{tpu_custom_call.1} parent=31 // pred_check
          %p296 = pneg %p107
        $region42: #{tpu_custom_call.1} parent=31 // pred_check_branch
          %298 = sbr.rel (%p296) target = $region44
        $region43: #{tpu_custom_call.1} parent=31 // pred_region
          %s300 = ssub.s32 128, 128
          %301 = vsyncadd %s292, %s300
          %s302 = smul.addr %s21, 128
          %s303 = scalar_lea.hbm %s3, %s302
          %s305 = sshll.u32 %s295, 4
          %s306 = int_to_ptr.vmem [resolvable:$true] %s305
          %308 = dma.vmem_to_hbm [thread:$0]  %s306, 128, %s303, %s292
        $region44: #{tpu_custom_call.1} parent=31 // pred_fallthru
          _
      $region32: #{tpu_custom_call.1} parent=5 // pred_fallthru
        _
      %p309 = scmp.le.s32.totalorder 2, %s16
      // Predicated region
      $region45: #{tpu_custom_call.1} parent=5 // pred_check
        %p310 = pneg %p309
      $region46: #{tpu_custom_call.1} parent=5 // pred_check_branch
        %312 = sbr.rel (%p310) target = $region48
      $region47: #{tpu_custom_call.1} parent=5 // pred_region
        %s313 = ssub.s32 %s16, 2
        // Predicated region
        $region49: #{tpu_custom_call.1} parent=47 // pred_check
          %p314 = pneg %p113
        $region50: #{tpu_custom_call.1} parent=47 // pred_check_branch
          %316 = sbr.rel (%p314) target = $region52
        $region51: #{tpu_custom_call.1} parent=47 // pred_region
          %s317 = sand.u32 %s98, 1
          %s318 = scalar_lea.sflag [#allocation4], %s317
          %s319 = sand.u32 %s98, 1
          %s320 = smul.addr %s319, 8
          %s321 = scalar_lea.vmem [#allocation7], %s320
          %322 = dma.done %s318, 128
        $region52: #{tpu_custom_call.1} parent=47 // pred_fallthru
          _
      $region48: #{tpu_custom_call.1} parent=5 // pred_fallthru
        _
    $region6: #{tpu_custom_call.1} parent=1 // loop_footer
      %s20 = sadd.s32 1, %s16
    $region7: #{tpu_custom_call.1} parent=1 // loop_footer_branch
      %15 = sbr.rel target = $region3
    $region8: #{tpu_custom_call.1} parent=1 // loop_exit
      _
    %323 = vsyncpa [#allocation3], 1
    %s324 = scalar_lea.sflag [#allocation3], 1
    %325 = vsyncpa %s324, 1
    %326 = vsyncpa [#allocation6], 1
    %327 = vsyncpa [#allocation4], 1
    %s328 = scalar_lea.sflag [#allocation4], 1
    %329 = vsyncpa %s328, 1

</llo_original>
